<compile_context>
chip_gen: v7x
topology: tpu7x:2x2x1
jax: 0.10.0
libtpu: 0.0.40
codegen_flags: <defaults>
</compile_context>

<pallas_src>
import jax
import jax.numpy as jnp
from jax.experimental import pallas as pl
from jax.experimental.pallas import tpu as pltpu

PACK = 16  # batch rows packed per lane-dense super-row (16 * 24 = 384 = 3*128)


def decoder_kernel(x_ref, w1_ref, b1_ref, w2_ref, b2_ref, o_ref):
    # hidden_fc: Linear(latent, hidden) + LeakyReLU(0.01)
    h = jnp.dot(x_ref[...], w1_ref[...], preferred_element_type=jnp.float32)
    h = h + b1_ref[...]
    h = jnp.maximum(h, 0.01 * h)                       # LeakyReLU, 2 VPU ops
    # decode_fc: Linear(hidden, 24) + Tanh (tanh uses the EUP slot)
    y = jnp.dot(h.astype(w2_ref.dtype), w2_ref[...],
                preferred_element_type=jnp.float32)
    y = jnp.tanh(y + b2_ref[...])
    # traj affine: the [0.5,1,0.5]/[0.5,0,0.5] pattern repeats every 3 lanes
    # (24 % 3 == 0), so build it in-register instead of DMA-ing constants.
    coord = jax.lax.broadcasted_iota(jnp.int32, y.shape, 1) % 3
    scale = jnp.where(coord == 1, 1.0, 0.5)
    shift = jnp.where(coord == 1, 0.0, 0.5)
    o_ref[...] = (y * scale + shift).astype(o_ref.dtype)


def _block_diag(w, reps):
    """(k, n) -> (reps*k, reps*n) block-diagonal replication of w."""
    k, n = w.shape
    eye = jnp.eye(reps, dtype=w.dtype)
    return (eye[:, None, :, None] * w[None, :, None, :]).reshape(reps * k,
                                                                 reps * n)


def decoder_forward(x, w1, b1, w2, b2, *, block_b=1024,
                    compute_dtype=jnp.bfloat16):
    """x: (B, latent) f32; w1: (latent, hidden); w2: (hidden, 24) -> (B, 8, 3) f32.

    Weights are stored (in_features, out_features), i.e. transposed vs
    PyTorch's nn.Linear weight, so the kernel computes x @ W + b.
    """
    B, latent_dim = x.shape
    hidden_dim = w1.shape[1]
    out_dim = w2.shape[1]
    assert out_dim == 24, "Decoder spec fixes the output at 8*3 = 24 features"

    # Batch tile: multiple of 128 so the packed tile has a multiple-of-8
    # sublane count and the packed output width stays lane-dense.
    block_b = -(-min(block_b, B) // 128) * 128
    b_pad = -(-B // block_b) * block_b
    if b_pad != B:
        x = jnp.concatenate(
            [x, jnp.zeros((b_pad - B, latent_dim), x.dtype)], axis=0)

    # Pack 16 rows per super-row (free row-major reshape) and expand weights
    # block-diagonally so the kernel never needs a lane-crossing reshape.
    xp = x.astype(compute_dtype).reshape(b_pad // PACK, PACK * latent_dim)
    w1p = _block_diag(w1, PACK).astype(compute_dtype)       # (16L, 16H)
    w2p = _block_diag(w2, PACK).astype(compute_dtype)       # (16H, 384)
    b1p = jnp.tile(b1.astype(jnp.float32), PACK)[None, :]   # (1, 16H)
    b2p = jnp.tile(b2.astype(jnp.float32), PACK)[None, :]   # (1, 384)

    rp = block_b // PACK           # packed rows per tile (multiple of 8)
    kin = PACK * latent_dim
    kh = PACK * hidden_dim
    kout = PACK * out_dim          # 384 = 3 * 128 -> unmasked stores

    grid = (b_pad // block_b,)
    out_flat = pl.pallas_call(
        decoder_kernel,
        out_shape=jax.ShapeDtypeStruct((b_pad // PACK, kout), jnp.float32),
        grid_spec=pltpu.PrefetchScalarGridSpec(
            num_scalar_prefetch=0,
            grid=grid,
            in_specs=[
                pl.BlockSpec((rp, kin), lambda i: (i, 0)),    # x (packed)
                pl.BlockSpec((kin, kh), lambda i: (0, 0)),    # W1 block-diag
                pl.BlockSpec((1, kh), lambda i: (0, 0)),      # b1 (tiled)
                pl.BlockSpec((kh, kout), lambda i: (0, 0)),   # W2 block-diag
                pl.BlockSpec((1, kout), lambda i: (0, 0)),    # b2 (tiled)
            ],
            out_specs=pl.BlockSpec((rp, kout), lambda i: (i, 0)),
        ),
        compiler_params=pltpu.CompilerParams(
            dimension_semantics=("parallel",),        # megacore split on v7x
            vmem_limit_bytes=32 * 1024 * 1024,
        ),
    )(xp, w1p, b1p, w2p, b2p)

    # Free metadata reshapes back to (B, 8, 3); slice drops the batch padding.
    return out_flat.reshape(b_pad, out_dim)[:B].reshape(B, 8, 3)


def init_decoder_params(key, latent_dim, hidden_dim):
    """Deterministic PyTorch-style (uniform +/- 1/sqrt(fan_in)) init."""
    k1, k2, k3, k4 = jax.random.split(key, 4)
    lim1 = 1.0 / jnp.sqrt(latent_dim)
    lim2 = 1.0 / jnp.sqrt(hidden_dim)
    w1 = jax.random.uniform(k1, (latent_dim, hidden_dim), jnp.float32,
                            -lim1, lim1)
    b1 = jax.random.uniform(k2, (hidden_dim,), jnp.float32, -lim1, lim1)
    w2 = jax.random.uniform(k3, (hidden_dim, 24), jnp.float32, -lim2, lim2)
    b2 = jax.random.uniform(k4, (24,), jnp.float32, -lim2, lim2)
    return w1, b1, w2, b2


def decoder_ref(x, w1, b1, w2, b2):
    """Pure-JAX reference mirroring the PyTorch forward."""
    h = x @ w1 + b1
    h = jnp.where(h > 0, h, 0.01 * h)
    y = jnp.tanh(h @ w2 + b2)
    y = y.reshape(-1, 8, 3)
    scale = jnp.array([0.5, 1.0, 0.5], jnp.float32)
    shift = jnp.array([0.5, 0.0, 0.5], jnp.float32)
    return y * scale + shift


if __name__ == "__main__":
    latent_dim = 16
    hidden_dim = 32
    batch = 8

    key = jax.random.PRNGKey(0)
    kx, kp = jax.random.split(key)
    x = jax.random.normal(kx, (batch, latent_dim), jnp.float32)
    w1, b1, w2, b2 = init_decoder_params(kp, latent_dim, hidden_dim)

    ref = decoder_ref(x, w1, b1, w2, b2)

    # f32 compute path: validates the fused math tightly.
    out_f32 = jax.block_until_ready(
        decoder_forward(x, w1, b1, w2, b2, compute_dtype=jnp.float32))
    assert out_f32.shape == (batch, 8, 3), out_f32.shape
    assert jnp.allclose(out_f32, ref, atol=1e-3, rtol=1e-3), (
        float(jnp.max(jnp.abs(out_f32 - ref))))

    # Default perf path: bf16 matmul inputs, f32 accumulation / epilogue.
    out_bf16 = jax.block_until_ready(decoder_forward(x, w1, b1, w2, b2))
    assert out_bf16.shape == (batch, 8, 3), out_bf16.shape
    assert jnp.allclose(out_bf16, ref, atol=5e-2, rtol=0.0), (
        float(jnp.max(jnp.abs(out_bf16 - ref))))

    print("KERNEL_OK")
</pallas_src>

<mosaic_0001>
module attributes {stable_mosaic.version = 11 : i64} {
  func.func @decoder_kernel(%arg0: i32, %arg1: memref<8x256xf32, #tpu.memory_space<vmem>>, %arg2: memref<256x512xf32, #tpu.memory_space<vmem>>, %arg3: memref<1x512xf32, #tpu.memory_space<vmem>>, %arg4: memref<512x384xf32, #tpu.memory_space<vmem>>, %arg5: memref<1x384xf32, #tpu.memory_space<vmem>>, %arg6: memref<8x384xf32, #tpu.memory_space<vmem>>) attributes {dimension_semantics = [#tpu.dimension_semantics<parallel>], iteration_bounds = array<i64: 1>, scalar_prefetch = 0 : i64, scratch_operands = 0 : i64, tpu.core_type = #tpu.core_type<tc>, window_params = [{transform_indices = @transform_0, window_bounds = array<i64: 8, 256>}, {pipeline_mode = #tpu.pipeline_mode<synchronous>, transform_indices = @transform_1, window_bounds = array<i64: 256, 512>}, {pipeline_mode = #tpu.pipeline_mode<synchronous>, transform_indices = @transform_2, window_bounds = array<i64: 1, 512>}, {pipeline_mode = #tpu.pipeline_mode<synchronous>, transform_indices = @transform_3, window_bounds = array<i64: 512, 384>}, {pipeline_mode = #tpu.pipeline_mode<synchronous>, transform_indices = @transform_4, window_bounds = array<i64: 1, 384>}, {transform_indices = @transform_5, window_bounds = array<i64: 8, 384>}]} {
    %c0 = arith.constant 0 : index
    %c0_0 = arith.constant 0 : index
    %0 = vector.load %arg1[%c0, %c0_0] : memref<8x256xf32, #tpu.memory_space<vmem>>, vector<8x256xf32>
    %c0_1 = arith.constant 0 : index
    %c0_2 = arith.constant 0 : index
    %1 = vector.load %arg2[%c0_1, %c0_2] : memref<256x512xf32, #tpu.memory_space<vmem>>, vector<256x512xf32>
    %cst = arith.constant dense<0.000000e+00> : vector<8x512xf32>
    %2 = tpu.matmul %0, %1, %cst {dimension_numbers = #tpu.dot_dimension_numbers<[1], [0], [0], [1], [0, 0, 1, 1], [], []>} : vector<8x256xf32>, vector<256x512xf32>, vector<8x512xf32> -> vector<8x512xf32>
    %c0_3 = arith.constant 0 : index
    %c0_4 = arith.constant 0 : index
    %3 = vector.load %arg3[%c0_3, %c0_4] : memref<1x512xf32, #tpu.memory_space<vmem>>, vector<1x512xf32>
    %4 = vector.broadcast %3 : vector<1x512xf32> to vector<8x512xf32>
    %5 = arith.addf %2, %4 : vector<8x512xf32>
    %cst_5 = arith.constant 0.00999999977 : f32
    %6 = vector.broadcast %cst_5 : f32 to vector<8x512xf32>
    %7 = arith.mulf %6, %5 : vector<8x512xf32>
    %8 = arith.maximumf %5, %7 : vector<8x512xf32>
    %c0_6 = arith.constant 0 : index
    %c0_7 = arith.constant 0 : index
    %9 = vector.load %arg4[%c0_6, %c0_7] : memref<512x384xf32, #tpu.memory_space<vmem>>, vector<512x384xf32>
    %cst_8 = arith.constant dense<0.000000e+00> : vector<8x384xf32>
    %10 = tpu.matmul %8, %9, %cst_8 {dimension_numbers = #tpu.dot_dimension_numbers<[1], [0], [0], [1], [0, 0, 1, 1], [], []>} : vector<8x512xf32>, vector<512x384xf32>, vector<8x384xf32> -> vector<8x384xf32>
    %c0_9 = arith.constant 0 : index
    %c0_10 = arith.constant 0 : index
    %11 = vector.load %arg5[%c0_9, %c0_10] : memref<1x384xf32, #tpu.memory_space<vmem>>, vector<1x384xf32>
    %12 = vector.broadcast %11 : vector<1x384xf32> to vector<8x384xf32>
    %13 = arith.addf %10, %12 : vector<8x384xf32>
    %14 = math.tanh %13 : vector<8x384xf32>
    %15 = tpu.iota {dimensions = array<i32: 1>} : vector<8x384xi32>
    %c3_i32 = arith.constant 3 : i32
    %c0_i32 = arith.constant 0 : i32
    %16 = arith.cmpi eq, %c3_i32, %c0_i32 : i32
    %c1_i32 = arith.constant 1 : i32
    %17 = arith.select %16, %c1_i32, %c3_i32 : i32
    %18 = vector.broadcast %17 : i32 to vector<8x384xi32>
    %19 = arith.remsi %15, %18 : vector<8x384xi32>
    %c0_i32_11 = arith.constant 0 : i32
    %20 = vector.broadcast %c0_i32_11 : i32 to vector<8x384xi32>
    %21 = arith.cmpi ne, %19, %20 : vector<8x384xi32>
    %c0_i32_12 = arith.constant 0 : i32
    %22 = vector.broadcast %c0_i32_12 : i32 to vector<8x384xi32>
    %23 = arith.cmpi slt, %19, %22 : vector<8x384xi32>
    %c0_i32_13 = arith.constant 0 : i32
    %24 = arith.cmpi slt, %17, %c0_i32_13 : i32
    %25 = vector.broadcast %24 : i1 to vector<8x384xi1>
    %26 = vector.broadcast %25 : vector<8x384xi1> to vector<8x384xi1>
    %27 = arith.xori %23, %26 : vector<8x384xi1>
    %28 = arith.andi %27, %21 : vector<8x384xi1>
    %29 = vector.broadcast %17 : i32 to vector<8x384xi32>
    %30 = arith.addi %19, %29 : vector<8x384xi32>
    %31 = arith.select %28, %30, %19 : vector<8x384xi1>, vector<8x384xi32>
    %c1_i32_14 = arith.constant 1 : i32
    %32 = vector.broadcast %c1_i32_14 : i32 to vector<8x384xi32>
    %33 = arith.cmpi eq, %31, %32 : vector<8x384xi32>
    %cst_15 = arith.constant 1.000000e+00 : f32
    %cst_16 = arith.constant 5.000000e-01 : f32
    %34 = vector.broadcast %cst_15 : f32 to vector<8x384xf32>
    %35 = vector.broadcast %cst_16 : f32 to vector<8x384xf32>
    %36 = arith.select %33, %34, %35 : vector<8x384xi1>, vector<8x384xf32>
    %c1_i32_17 = arith.constant 1 : i32
    %37 = vector.broadcast %c1_i32_17 : i32 to vector<8x384xi32>
    %38 = arith.cmpi eq, %31, %37 : vector<8x384xi32>
    %cst_18 = arith.constant 0.000000e+00 : f32
    %cst_19 = arith.constant 5.000000e-01 : f32
    %39 = vector.broadcast %cst_18 : f32 to vector<8x384xf32>
    %40 = vector.broadcast %cst_19 : f32 to vector<8x384xf32>
    %41 = arith.select %38, %39, %40 : vector<8x384xi1>, vector<8x384xf32>
    %42 = arith.mulf %14, %36 : vector<8x384xf32>
    %43 = arith.addf %42, %41 : vector<8x384xf32>
    %c0_20 = arith.constant 0 : index
    %c0_21 = arith.constant 0 : index
    %44 = vector.load %arg6[%c0_20, %c0_21] : memref<8x384xf32, #tpu.memory_space<vmem>>, vector<8x384xf32>
    tpu.vector_store %arg6[%c0_20, %c0_21], %43 {strides = array<i32>} : memref<8x384xf32, #tpu.memory_space<vmem>>, vector<8x384xf32>,
    return
  }
  func.func @transform_0(%arg0: i32) -> (i32, i32) {
    %c0_i32 = arith.constant 0 : i32
    %c0_i32_0 = arith.constant 0 : i32
    return %arg0, %c0_i32 : i32, i32
  }
  func.func @transform_1(%arg0: i32) -> (i32, i32) {
    %c0_i32 = arith.constant 0 : i32
    %c0_i32_0 = arith.constant 0 : i32
    %c0_i32_1 = arith.constant 0 : i32
    return %c0_i32, %c0_i32_0 : i32, i32
  }
  func.func @transform_2(%arg0: i32) -> (i32, i32) {
    %c0_i32 = arith.constant 0 : i32
    %c0_i32_0 = arith.constant 0 : i32
    %c0_i32_1 = arith.constant 0 : i32
    return %c0_i32, %c0_i32_0 : i32, i32
  }
  func.func @transform_3(%arg0: i32) -> (i32, i32) {
    %c0_i32 = arith.constant 0 : i32
    %c0_i32_0 = arith.constant 0 : i32
    %c0_i32_1 = arith.constant 0 : i32
    return %c0_i32, %c0_i32_0 : i32, i32
  }
  func.func @transform_4(%arg0: i32) -> (i32, i32) {
    %c0_i32 = arith.constant 0 : i32
    %c0_i32_0 = arith.constant 0 : i32
    %c0_i32_1 = arith.constant 0 : i32
    return %c0_i32, %c0_i32_0 : i32, i32
  }
  func.func @transform_5(%arg0: i32) -> (i32, i32) {
    %c0_i32 = arith.constant 0 : i32
    %c0_i32_0 = arith.constant 0 : i32
    return %arg0, %c0_i32 : i32, i32
  }
}

</mosaic_0001>

<llo_original>
// kernel: tpu_custom_call.1
$region0: #{tpu_custom_call.1}
  #allocation0 [shape = 'u32[]', space=smem, size = 0x4, offset = 0x4, fixed_abs, tag = 'smem constant byte address 0x4 - core index']
  #allocation1 [shape = 'u32[144,128]{1,0:T(1,128)}', space=vmem, size = 0x12000, scoped, tag = 'internal scratch']
  %s0 = inlined_call_operand.hbm [shape: f32[8,256], index: 0, kind: input, shape index: {}]
  %s1 = inlined_call_operand.hbm [shape: f32[256,512], index: 1, kind: input, shape index: {}]
  %s2 = inlined_call_operand.vmem [shape: f32[1,512], index: 2, kind: input, shape index: {}]
  %s3 = inlined_call_operand.hbm [shape: f32[512,384], index: 3, kind: input, shape index: {}]
  %s4 = inlined_call_operand.vmem [shape: f32[1,384], index: 4, kind: input, shape index: {}]
  %s5 = inlined_call_operand.hbm [shape: f32[8,384], index: 5, kind: output, shape index: {}]
  %s6 = sld [smem:[#allocation0]]
  $region42: #{tpu_custom_call.1} parent=0
    _
  %s8 = ssub.s32 1, %s6
  %s9 = scalar_select 0, %s8, %s6
  $region1: #{tpu_custom_call.1} parent=0
    #allocation2 [shape = 'u8[8192]{0}', space=vmem, size = 0x2000, scoped, tag = 'input window, operand 0, single buffered']
    #allocation3 [shape = 's32[1]{0}', space=sflag, size = 0x4, scoped, tag = 'scoped memory for tpu_custom_call.1']
    #allocation4 [shape = 's32[1]{0}', space=sflag, size = 0x4, scoped, tag = 'scoped memory for tpu_custom_call.1']
    #allocation5 [shape = 'u8[524288]{0}', space=vmem, size = 0x80000, scoped, tag = 'input window, operand 1, single buffered']
    #allocation6 [shape = 's32[1]{0}', space=sflag, size = 0x4, scoped, tag = 'scoped memory for tpu_custom_call.1']
    #allocation7 [shape = 'u8[786432]{0}', space=vmem, size = 0xc0000, scoped, tag = 'input window, operand 3, single buffered']
    #allocation8 [shape = 'u8[12288]{0}', space=vmem, size = 0x3000, scoped, tag = 'output window, operand 0, single buffered']
    %10 = vsyncpa [#allocation3], 0
    %11 = vsyncpa [#allocation6], 0
    %12 = vsyncpa [#allocation4], 0
    // Predicated region
    $region2: #{tpu_custom_call.1} parent=1 // pred_check
      _
    $region3: #{tpu_custom_call.1} parent=1 // pred_check_branch
      %14 = sbr.rel (0) target = $region5
    $region4: #{tpu_custom_call.1} parent=1 // pred_region
      %s16 = ssub.s32 256, 256
      %17 = vsyncadd [#allocation3], %s16
      %s19 = sshll.u32 [#allocation2], 4
      %s20 = int_to_ptr.vmem [resolvable:$true] %s19
      %22 = dma.hbm_to_vmem [thread:$0]  %s0, 256, %s20, [#allocation3]
    $region5: #{tpu_custom_call.1} parent=1 // pred_fallthru
      _
    // Predicated region
    $region6: #{tpu_custom_call.1} parent=1 // pred_check
      _
    $region7: #{tpu_custom_call.1} parent=1 // pred_check_branch
      %24 = sbr.rel (0) target = $region9
    $region8: #{tpu_custom_call.1} parent=1 // pred_region
      %s26 = ssub.s32 16384, 16384
      %27 = vsyncadd [#allocation6], %s26
      %s28 = sshll.u32 [#allocation5], 4
      %s29 = int_to_ptr.vmem [resolvable:$true] %s28
      %34 = dma.hbm_to_vmem [thread:$0]  %s1, 16384, %s29, [#allocation6], 512, 512, 32
    $region9: #{tpu_custom_call.1} parent=1 // pred_fallthru
      _
    // Predicated region
    $region10: #{tpu_custom_call.1} parent=1 // pred_check
      _
    $region11: #{tpu_custom_call.1} parent=1 // pred_check_branch
      %36 = sbr.rel (0) target = $region13
    $region12: #{tpu_custom_call.1} parent=1 // pred_region
      _
    $region13: #{tpu_custom_call.1} parent=1 // pred_fallthru
      _
    // Predicated region
    $region14: #{tpu_custom_call.1} parent=1 // pred_check
      _
    $region15: #{tpu_custom_call.1} parent=1 // pred_check_branch
      %38 = sbr.rel (0) target = $region17
    $region16: #{tpu_custom_call.1} parent=1 // pred_region
      %s40 = ssub.s32 24576, 24576
      %41 = vsyncadd [#allocation6], %s40
      %s42 = sshll.u32 [#allocation7], 4
      %s43 = int_to_ptr.vmem [resolvable:$true] %s42
      %48 = dma.hbm_to_vmem [thread:$0]  %s3, 24576, %s43, [#allocation6], 384, 384, 24
    $region17: #{tpu_custom_call.1} parent=1 // pred_fallthru
      _
    // Predicated region
    $region18: #{tpu_custom_call.1} parent=1 // pred_check
      _
    $region19: #{tpu_custom_call.1} parent=1 // pred_check_branch
      %50 = sbr.rel (0) target = $region21
    $region20: #{tpu_custom_call.1} parent=1 // pred_region
      _
    $region21: #{tpu_custom_call.1} parent=1 // pred_fallthru
      _
    // Predicated region
    $region22: #{tpu_custom_call.1} parent=1 // pred_check
      _
    $region23: #{tpu_custom_call.1} parent=1 // pred_check_branch
      %52 = sbr.rel (0) target = $region25
    $region24: #{tpu_custom_call.1} parent=1 // pred_region
      %53 = dma.done [#allocation3], 256
    $region25: #{tpu_custom_call.1} parent=1 // pred_fallthru
      _
    // Predicated region
    $region26: #{tpu_custom_call.1} parent=1 // pred_check
      _
    $region27: #{tpu_custom_call.1} parent=1 // pred_check_branch
      %55 = sbr.rel (0) target = $region29
    $region28: #{tpu_custom_call.1} parent=1 // pred_region
      %56 = dma.done [#allocation6], 16384
    $region29: #{tpu_custom_call.1} parent=1 // pred_fallthru
      _
    // Predicated region
    $region30: #{tpu_custom_call.1} parent=1 // pred_check
      _
    $region31: #{tpu_custom_call.1} parent=1 // pred_check_branch
      %58 = sbr.rel (0) target = $region33
    $region32: #{tpu_custom_call.1} parent=1 // pred_region
      %59 = dma.done [#allocation6], 24576
    $region33: #{tpu_custom_call.1} parent=1 // pred_fallthru
      _
    %v60 = vld [vmem:[#allocation2] sm:$0xff]
    %v61 = vld [vmem:[#allocation2 + $0x8] sm:$0xff]
    %v62 = vld [vmem:[#allocation5] sm:$0xff]
    %v63 = vld [vmem:[#allocation5 + $0x8] sm:$0xff]
    %v64 = vld [vmem:[#allocation5 + $0x10] sm:$0xff]
    %v65 = vld [vmem:[#allocation5 + $0x18] sm:$0xff]
    %v66 = vld [vmem:[#allocation5 + $0x20] sm:$0xff]
    %v67 = vld [vmem:[#allocation5 + $0x28] sm:$0xff]
    %v68 = vld [vmem:[#allocation5 + $0x30] sm:$0xff]
    %v69 = vld [vmem:[#allocation5 + $0x38] sm:$0xff]
    %v70 = vld [vmem:[#allocation5 + $0x40] sm:$0xff]
    %v71 = vld [vmem:[#allocation5 + $0x48] sm:$0xff]
    %v72 = vld [vmem:[#allocation5 + $0x50] sm:$0xff]
    %v73 = vld [vmem:[#allocation5 + $0x58] sm:$0xff]
    %v74 = vld [vmem:[#allocation5 + $0x60] sm:$0xff]
    %v75 = vld [vmem:[#allocation5 + $0x68] sm:$0xff]
    %v76 = vld [vmem:[#allocation5 + $0x70] sm:$0xff]
    %v77 = vld [vmem:[#allocation5 + $0x78] sm:$0xff]
    %v78 = vld [vmem:[#allocation5 + $0x80] sm:$0xff]
    %v79 = vld [vmem:[#allocation5 + $0x88] sm:$0xff]
    %v80 = vld [vmem:[#allocation5 + $0x90] sm:$0xff]
    %v81 = vld [vmem:[#allocation5 + $0x98] sm:$0xff]
    %v82 = vld [vmem:[#allocation5 + $0xa0] sm:$0xff]
    %v83 = vld [vmem:[#allocation5 + $0xa8] sm:$0xff]
    %v84 = vld [vmem:[#allocation5 + $0xb0] sm:$0xff]
    %v85 = vld [vmem:[#allocation5 + $0xb8] sm:$0xff]
    %v86 = vld [vmem:[#allocation5 + $0xc0] sm:$0xff]
    %v87 = vld [vmem:[#allocation5 + $0xc8] sm:$0xff]
    %v88 = vld [vmem:[#allocation5 + $0xd0] sm:$0xff]
    %v89 = vld [vmem:[#allocation5 + $0xd8] sm:$0xff]
    %v90 = vld [vmem:[#allocation5 + $0xe0] sm:$0xff]
    %v91 = vld [vmem:[#allocation5 + $0xe8] sm:$0xff]
    %v92 = vld [vmem:[#allocation5 + $0xf0] sm:$0xff]
    %v93 = vld [vmem:[#allocation5 + $0xf8] sm:$0xff]
    %v94 = vld [vmem:[#allocation5 + $0x100] sm:$0xff]
    %v95 = vld [vmem:[#allocation5 + $0x108] sm:$0xff]
    %v96 = vld [vmem:[#allocation5 + $0x110] sm:$0xff]
    %v97 = vld [vmem:[#allocation5 + $0x118] sm:$0xff]
    %v98 = vld [vmem:[#allocation5 + $0x120] sm:$0xff]
    %v99 = vld [vmem:[#allocation5 + $0x128] sm:$0xff]
    %v100 = vld [vmem:[#allocation5 + $0x130] sm:$0xff]
    %v101 = vld [vmem:[#allocation5 + $0x138] sm:$0xff]
    %v102 = vld [vmem:[#allocation5 + $0x140] sm:$0xff]
    %v103 = vld [vmem:[#allocation5 + $0x148] sm:$0xff]
    %v104 = vld [vmem:[#allocation5 + $0x150] sm:$0xff]
    %v105 = vld [vmem:[#allocation5 + $0x158] sm:$0xff]
    %v106 = vld [vmem:[#allocation5 + $0x160] sm:$0xff]
    %v107 = vld [vmem:[#allocation5 + $0x168] sm:$0xff]
    %v108 = vld [vmem:[#allocation5 + $0x170] sm:$0xff]
    %v109 = vld [vmem:[#allocation5 + $0x178] sm:$0xff]
    %v110 = vld [vmem:[#allocation5 + $0x180] sm:$0xff]
    %v111 = vld [vmem:[#allocation5 + $0x188] sm:$0xff]
    %v112 = vld [vmem:[#allocation5 + $0x190] sm:$0xff]
    %v113 = vld [vmem:[#allocation5 + $0x198] sm:$0xff]
    %v114 = vld [vmem:[#allocation5 + $0x1a0] sm:$0xff]
    %v115 = vld [vmem:[#allocation5 + $0x1a8] sm:$0xff]
    %v116 = vld [vmem:[#allocation5 + $0x1b0] sm:$0xff]
    %v117 = vld [vmem:[#allocation5 + $0x1b8] sm:$0xff]
    %v118 = vld [vmem:[#allocation5 + $0x1c0] sm:$0xff]
    %v119 = vld [vmem:[#allocation5 + $0x1c8] sm:$0xff]
    %v120 = vld [vmem:[#allocation5 + $0x1d0] sm:$0xff]
    %v121 = vld [vmem:[#allocation5 + $0x1d8] sm:$0xff]
    %v122 = vld [vmem:[#allocation5 + $0x1e0] sm:$0xff]
    %v123 = vld [vmem:[#allocation5 + $0x1e8] sm:$0xff]
    %v124 = vld [vmem:[#allocation5 + $0x1f0] sm:$0xff]
    %v125 = vld [vmem:[#allocation5 + $0x1f8] sm:$0xff]
    %v126 = vld [vmem:[#allocation5 + $0x200] sm:$0xff]
    %v127 = vld [vmem:[#allocation5 + $0x208] sm:$0xff]
    %v128 = vld [vmem:[#allocation5 + $0x210] sm:$0xff]
    %v129 = vld [vmem:[#allocation5 + $0x218] sm:$0xff]
    %v130 = vld [vmem:[#allocation5 + $0x220] sm:$0xff]
    %v131 = vld [vmem:[#allocation5 + $0x228] sm:$0xff]
    %v132 = vld [vmem:[#allocation5 + $0x230] sm:$0xff]
    %v133 = vld [vmem:[#allocation5 + $0x238] sm:$0xff]
    %v134 = vld [vmem:[#allocation5 + $0x240] sm:$0xff]
    %v135 = vld [vmem:[#allocation5 + $0x248] sm:$0xff]
    %v136 = vld [vmem:[#allocation5 + $0x250] sm:$0xff]
    %v137 = vld [vmem:[#allocation5 + $0x258] sm:$0xff]
    %v138 = vld [vmem:[#allocation5 + $0x260] sm:$0xff]
    %v139 = vld [vmem:[#allocation5 + $0x268] sm:$0xff]
    %v140 = vld [vmem:[#allocation5 + $0x270] sm:$0xff]
    %v141 = vld [vmem:[#allocation5 + $0x278] sm:$0xff]
    %v142 = vld [vmem:[#allocation5 + $0x280] sm:$0xff]
    %v143 = vld [vmem:[#allocation5 + $0x288] sm:$0xff]
    %v144 = vld [vmem:[#allocation5 + $0x290] sm:$0xff]
    %v145 = vld [vmem:[#allocation5 + $0x298] sm:$0xff]
    %v146 = vld [vmem:[#allocation5 + $0x2a0] sm:$0xff]
    %v147 = vld [vmem:[#allocation5 + $0x2a8] sm:$0xff]
    %v148 = vld [vmem:[#allocation5 + $0x2b0] sm:$0xff]
    %v149 = vld [vmem:[#allocation5 + $0x2b8] sm:$0xff]
    %v150 = vld [vmem:[#allocation5 + $0x2c0] sm:$0xff]
    %v151 = vld [vmem:[#allocation5 + $0x2c8] sm:$0xff]
    %v152 = vld [vmem:[#allocation5 + $0x2d0] sm:$0xff]
    %v153 = vld [vmem:[#allocation5 + $0x2d8] sm:$0xff]
    %v154 = vld [vmem:[#allocation5 + $0x2e0] sm:$0xff]
    %v155 = vld [vmem:[#allocation5 + $0x2e8] sm:$0xff]
    %v156 = vld [vmem:[#allocation5 + $0x2f0] sm:$0xff]
    %v157 = vld [vmem:[#allocation5 + $0x2f8] sm:$0xff]
    %v158 = vld [vmem:[#allocation5 + $0x300] sm:$0xff]
    %v159 = vld [vmem:[#allocation5 + $0x308] sm:$0xff]
    %v160 = vld [vmem:[#allocation5 + $0x310] sm:$0xff]
    %v161 = vld [vmem:[#allocation5 + $0x318] sm:$0xff]
    %v162 = vld [vmem:[#allocation5 + $0x320] sm:$0xff]
    %v163 = vld [vmem:[#allocation5 + $0x328] sm:$0xff]
    %v164 = vld [vmem:[#allocation5 + $0x330] sm:$0xff]
    %v165 = vld [vmem:[#allocation5 + $0x338] sm:$0xff]
    %v166 = vld [vmem:[#allocation5 + $0x340] sm:$0xff]
    %v167 = vld [vmem:[#allocation5 + $0x348] sm:$0xff]
    %v168 = vld [vmem:[#allocation5 + $0x350] sm:$0xff]
    %v169 = vld [vmem:[#allocation5 + $0x358] sm:$0xff]
    %v170 = vld [vmem:[#allocation5 + $0x360] sm:$0xff]
    %v171 = vld [vmem:[#allocation5 + $0x368] sm:$0xff]
    %v172 = vld [vmem:[#allocation5 + $0x370] sm:$0xff]
    %v173 = vld [vmem:[#allocation5 + $0x378] sm:$0xff]
    %v174 = vld [vmem:[#allocation5 + $0x380] sm:$0xff]
    %v175 = vld [vmem:[#allocation5 + $0x388] sm:$0xff]
    %v176 = vld [vmem:[#allocation5 + $0x390] sm:$0xff]
    %v177 = vld [vmem:[#allocation5 + $0x398] sm:$0xff]
    %v178 = vld [vmem:[#allocation5 + $0x3a0] sm:$0xff]
    %v179 = vld [vmem:[#allocation5 + $0x3a8] sm:$0xff]
    %v180 = vld [vmem:[#allocation5 + $0x3b0] sm:$0xff]
    %v181 = vld [vmem:[#allocation5 + $0x3b8] sm:$0xff]
    %v182 = vld [vmem:[#allocation5 + $0x3c0] sm:$0xff]
    %v183 = vld [vmem:[#allocation5 + $0x3c8] sm:$0xff]
    %v184 = vld [vmem:[#allocation5 + $0x3d0] sm:$0xff]
    %v185 = vld [vmem:[#allocation5 + $0x3d8] sm:$0xff]
    %v186 = vld [vmem:[#allocation5 + $0x3e0] sm:$0xff]
    %v187 = vld [vmem:[#allocation5 + $0x3e8] sm:$0xff]
    %v188 = vld [vmem:[#allocation5 + $0x3f0] sm:$0xff]
    %v189 = vld [vmem:[#allocation5 + $0x3f8] sm:$0xff]
    %v190 = vld [vmem:[%s2] sm:$0xf]
    %v192 = vlaneseq
    %v193 = vshrl.u32 %v192, 7
    %v194 = vsub.s32 0, %v193
    %v195 = vrot.slane %v190, %v194
    %v196 = vlaneseq
    %v197 = vshrl.u32 %v196, 7
    %v198 = vsub.s32 1, %v197
    %v199 = vrot.slane %v190, %v198
    %v200 = vlaneseq
    %v201 = vshrl.u32 %v200, 7
    %v202 = vsub.s32 2, %v201
    %v203 = vrot.slane %v190, %v202
    %v204 = vlaneseq
    %v205 = vshrl.u32 %v204, 7
    %v206 = vsub.s32 3, %v205
    %v207 = vrot.slane %v190, %v206
    %212 = vmatprep.subr.mxu0 %v63
    %213 = vmatpush1.msra.mxu0 %v62
    %214 = vmatprep.subr.mxu0 %v67
    %215 = vmatpush1.msra.mxu0 %v66
    %216 = vmatprep.subr.mxu0 %v71
    %217 = vmatpush1.msra.mxu0 %v70
    %218 = vmatprep.subr.mxu0 %v75
    %219 = vmatpush1.msra.mxu0 %v74
    %220 = vmatprep.subr.mxu0 %v79
    %221 = vmatpush1.msra.mxu0 %v78
    %222 = vmatprep.subr.mxu0 %v83
    %223 = vmatpush1.msra.mxu0 %v82
    %224 = vmatprep.subr.mxu0 %v87
    %225 = vmatpush1.msra.mxu0 %v86
    %226 = vmatprep.subr.mxu0 %v91
    %227 = vmatpush1.msra.mxu0 %v90
    %228 = vmatprep.subr.mxu0 %v95
    %229 = vmatpush1.msra.mxu0 %v94
    %230 = vmatprep.subr.mxu0 %v99
    %231 = vmatpush1.msra.mxu0 %v98
    %232 = vmatprep.subr.mxu0 %v103
    %233 = vmatpush1.msra.mxu0 %v102
    %234 = vmatprep.subr.mxu0 %v107
    %235 = vmatpush1.msra.mxu0 %v106
    %236 = vmatprep.subr.mxu0 %v111
    %237 = vmatpush1.msra.mxu0 %v110
    %238 = vmatprep.subr.mxu0 %v115
    %239 = vmatpush1.msra.mxu0 %v114
    %240 = vmatprep.subr.mxu0 %v119
    %241 = vmatpush1.msra.mxu0 %v118
    %242 = vmatprep.subr.mxu0 %v123
    %243 = vmatpush1.msra.mxu0 %v122
    %244 = vmatprep.subr.mxu0 %v127
    %245 = vmatpush1.msra.mxu0 %v126
    %246 = vmatprep.subr.mxu0 %v131
    %247 = vmatpush1.msra.mxu0 %v130
    %248 = vmatprep.subr.mxu0 %v135
    %249 = vmatpush1.msra.mxu0 %v134
    %250 = vmatprep.subr.mxu0 %v139
    %251 = vmatpush1.msra.mxu0 %v138
    %252 = vmatprep.subr.mxu0 %v143
    %253 = vmatpush1.msra.mxu0 %v142
    %254 = vmatprep.subr.mxu0 %v147
    %255 = vmatpush1.msra.mxu0 %v146
    %256 = vmatprep.subr.mxu0 %v151
    %257 = vmatpush1.msra.mxu0 %v150
    %258 = vmatprep.subr.mxu0 %v155
    %259 = vmatpush1.msra.mxu0 %v154
    %260 = vmatprep.subr.mxu0 %v159
    %261 = vmatpush1.msra.mxu0 %v158
    %262 = vmatprep.subr.mxu0 %v163
    %263 = vmatpush1.msra.mxu0 %v162
    %264 = vmatprep.subr.mxu0 %v167
    %265 = vmatpush1.msra.mxu0 %v166
    %266 = vmatprep.subr.mxu0 %v171
    %267 = vmatpush1.msra.mxu0 %v170
    %268 = vmatprep.subr.mxu0 %v175
    %269 = vmatpush1.msra.mxu0 %v174
    %270 = vmatprep.subr.mxu0 %v179
    %271 = vmatpush1.msra.mxu0 %v178
    %272 = vmatprep.subr.mxu0 %v183
    %273 = vmatpush1.msra.mxu0 %v182
    %274 = vmatprep.subr.mxu0 %v187
    %275 = vmatpush1.msra.mxu0 %v186
    %276 = vmatprep.mubr.f32.mxu0 %v61
    %277 = vmatmul.mubr.f32.gmra.mrb[0].mxu0 %v60
    %v278 = vpop.f32.mrb[0].mxu0
    %v279 = vadd.f32 %v195, %v278
    %v280 = vpop.f32.mrb[0].mxu0
    %v281 = vadd.f32 %v199, %v280
    %282 = vdwg.mxu0
    %283 = vmatprep.subr.mxu0 %v65
    %284 = vmatpush1.msra.mxu0 %v64
    %285 = vmatprep.subr.mxu0 %v69
    %286 = vmatpush1.msra.mxu0 %v68
    %287 = vmatprep.subr.mxu0 %v73
    %288 = vmatpush1.msra.mxu0 %v72
    %289 = vmatprep.subr.mxu0 %v77
    %290 = vmatpush1.msra.mxu0 %v76
    %291 = vmatprep.subr.mxu0 %v81
    %292 = vmatpush1.msra.mxu0 %v80
    %293 = vmatprep.subr.mxu0 %v85
    %294 = vmatpush1.msra.mxu0 %v84
    %295 = vmatprep.subr.mxu0 %v89
    %296 = vmatpush1.msra.mxu0 %v88
    %297 = vmatprep.subr.mxu0 %v93
    %298 = vmatpush1.msra.mxu0 %v92
    %299 = vmatprep.subr.mxu0 %v97
    %300 = vmatpush1.msra.mxu0 %v96
    %301 = vmatprep.subr.mxu0 %v101
    %302 = vmatpush1.msra.mxu0 %v100
    %303 = vmatprep.subr.mxu0 %v105
    %304 = vmatpush1.msra.mxu0 %v104
    %305 = vmatprep.subr.mxu0 %v109
    %306 = vmatpush1.msra.mxu0 %v108
    %307 = vmatprep.subr.mxu0 %v113
    %308 = vmatpush1.msra.mxu0 %v112
    %309 = vmatprep.subr.mxu0 %v117
    %310 = vmatpush1.msra.mxu0 %v116
    %311 = vmatprep.subr.mxu0 %v121
    %312 = vmatpush1.msra.mxu0 %v120
    %313 = vmatprep.subr.mxu0 %v125
    %314 = vmatpush1.msra.mxu0 %v124
    %315 = vmatprep.subr.mxu0 %v129
    %316 = vmatpush1.msra.mxu0 %v128
    %317 = vmatprep.subr.mxu0 %v133
    %318 = vmatpush1.msra.mxu0 %v132
    %319 = vmatprep.subr.mxu0 %v137
    %320 = vmatpush1.msra.mxu0 %v136
    %321 = vmatprep.subr.mxu0 %v141
    %322 = vmatpush1.msra.mxu0 %v140
    %323 = vmatprep.subr.mxu0 %v145
    %324 = vmatpush1.msra.mxu0 %v144
    %325 = vmatprep.subr.mxu0 %v149
    %326 = vmatpush1.msra.mxu0 %v148
    %327 = vmatprep.subr.mxu0 %v153
    %328 = vmatpush1.msra.mxu0 %v152
    %329 = vmatprep.subr.mxu0 %v157
    %330 = vmatpush1.msra.mxu0 %v156
    %331 = vmatprep.subr.mxu0 %v161
    %332 = vmatpush1.msra.mxu0 %v160
    %333 = vmatprep.subr.mxu0 %v165
    %334 = vmatpush1.msra.mxu0 %v164
    %335 = vmatprep.subr.mxu0 %v169
    %336 = vmatpush1.msra.mxu0 %v168
    %337 = vmatprep.subr.mxu0 %v173
    %338 = vmatpush1.msra.mxu0 %v172
    %339 = vmatprep.subr.mxu0 %v177
    %340 = vmatpush1.msra.mxu0 %v176
    %341 = vmatprep.subr.mxu0 %v181
    %342 = vmatpush1.msra.mxu0 %v180
    %343 = vmatprep.subr.mxu0 %v185
    %344 = vmatpush1.msra.mxu0 %v184
    %345 = vmatprep.subr.mxu0 %v189
    %346 = vmatpush1.msra.mxu0 %v188
    %347 = vmatprep.mubr.f32.mxu0 %v61
    %348 = vmatmul.mubr.f32.gmra.mrb[0].mxu0 %v60
    %v349 = vpop.f32.mrb[0].mxu0
    %v350 = vadd.f32 %v203, %v349
    %v351 = vpop.f32.mrb[0].mxu0
    %v352 = vadd.f32 %v207, %v351
    %353 = vdwg.mxu0
    %v354 = vmul.f32 %v279, 0.01
    %v355 = vmul.f32 %v281, 0.01
    %v356 = vmul.f32 %v350, 0.01
    %v357 = vmul.f32 %v352, 0.01
    %v358 = vmax.f32 %v279, %v354
    %v359 = vmax.f32 %v281, %v355
    %v360 = vmax.f32 %v350, %v356
    %v361 = vmax.f32 %v352, %v357
    %v362 = vld [vmem:[#allocation7] sm:$0xff]
    %v363 = vld [vmem:[#allocation7 + $0x8] sm:$0xff]
    %v364 = vld [vmem:[#allocation7 + $0x10] sm:$0xff]
    %v365 = vld [vmem:[#allocation7 + $0x18] sm:$0xff]
    %v366 = vld [vmem:[#allocation7 + $0x20] sm:$0xff]
    %v367 = vld [vmem:[#allocation7 + $0x28] sm:$0xff]
    %v368 = vld [vmem:[#allocation7 + $0x30] sm:$0xff]
    %v369 = vld [vmem:[#allocation7 + $0x38] sm:$0xff]
    %v370 = vld [vmem:[#allocation7 + $0x40] sm:$0xff]
    %v371 = vld [vmem:[#allocation7 + $0x48] sm:$0xff]
    %v372 = vld [vmem:[#allocation7 + $0x50] sm:$0xff]
    %v373 = vld [vmem:[#allocation7 + $0x58] sm:$0xff]
    %v374 = vld [vmem:[#allocation7 + $0x60] sm:$0xff]
    %v375 = vld [vmem:[#allocation7 + $0x68] sm:$0xff]
    %v376 = vld [vmem:[#allocation7 + $0x70] sm:$0xff]
    %v377 = vld [vmem:[#allocation7 + $0x78] sm:$0xff]
    %v378 = vld [vmem:[#allocation7 + $0x80] sm:$0xff]
    %v379 = vld [vmem:[#allocation7 + $0x88] sm:$0xff]
    %v380 = vld [vmem:[#allocation7 + $0x90] sm:$0xff]
    %v381 = vld [vmem:[#allocation7 + $0x98] sm:$0xff]
    %v382 = vld [vmem:[#allocation7 + $0xa0] sm:$0xff]
    %v383 = vld [vmem:[#allocation7 + $0xa8] sm:$0xff]
    %v384 = vld [vmem:[#allocation7 + $0xb0] sm:$0xff]
    %v385 = vld [vmem:[#allocation7 + $0xb8] sm:$0xff]
    %v386 = vld [vmem:[#allocation7 + $0xc0] sm:$0xff]
    %v387 = vld [vmem:[#allocation7 + $0xc8] sm:$0xff]
    %v388 = vld [vmem:[#allocation7 + $0xd0] sm:$0xff]
    %v389 = vld [vmem:[#allocation7 + $0xd8] sm:$0xff]
    %v390 = vld [vmem:[#allocation7 + $0xe0] sm:$0xff]
    %v391 = vld [vmem:[#allocation7 + $0xe8] sm:$0xff]
    %v392 = vld [vmem:[#allocation7 + $0xf0] sm:$0xff]
    %v393 = vld [vmem:[#allocation7 + $0xf8] sm:$0xff]
    %v394 = vld [vmem:[#allocation7 + $0x100] sm:$0xff]
    %v395 = vld [vmem:[#allocation7 + $0x108] sm:$0xff]
    %v396 = vld [vmem:[#allocation7 + $0x110] sm:$0xff]
    %v397 = vld [vmem:[#allocation7 + $0x118] sm:$0xff]
    %v398 = vld [vmem:[#allocation7 + $0x120] sm:$0xff]
    %v399 = vld [vmem:[#allocation7 + $0x128] sm:$0xff]
    %v400 = vld [vmem:[#allocation7 + $0x130] sm:$0xff]
    %v401 = vld [vmem:[#allocation7 + $0x138] sm:$0xff]
    %v402 = vld [vmem:[#allocation7 + $0x140] sm:$0xff]
    %v403 = vld [vmem:[#allocation7 + $0x148] sm:$0xff]
    %v404 = vld [vmem:[#allocation7 + $0x150] sm:$0xff]
    %v405 = vld [vmem:[#allocation7 + $0x158] sm:$0xff]
    %v406 = vld [vmem:[#allocation7 + $0x160] sm:$0xff]
    %v407 = vld [vmem:[#allocation7 + $0x168] sm:$0xff]
    %v408 = vld [vmem:[#allocation7 + $0x170] sm:$0xff]
    %v409 = vld [vmem:[#allocation7 + $0x178] sm:$0xff]
    %v410 = vld [vmem:[#allocation7 + $0x180] sm:$0xff]
    %v411 = vld [vmem:[#allocation7 + $0x188] sm:$0xff]
    %v412 = vld [vmem:[#allocation7 + $0x190] sm:$0xff]
    %v413 = vld [vmem:[#allocation7 + $0x198] sm:$0xff]
    %v414 = vld [vmem:[#allocation7 + $0x1a0] sm:$0xff]
    %v415 = vld [vmem:[#allocation7 + $0x1a8] sm:$0xff]
    %v416 = vld [vmem:[#allocation7 + $0x1b0] sm:$0xff]
    %v417 = vld [vmem:[#allocation7 + $0x1b8] sm:$0xff]
    %v418 = vld [vmem:[#allocation7 + $0x1c0] sm:$0xff]
    %v419 = vld [vmem:[#allocation7 + $0x1c8] sm:$0xff]
    %v420 = vld [vmem:[#allocation7 + $0x1d0] sm:$0xff]
    %v421 = vld [vmem:[#allocation7 + $0x1d8] sm:$0xff]
    %v422 = vld [vmem:[#allocation7 + $0x1e0] sm:$0xff]
    %v423 = vld [vmem:[#allocation7 + $0x1e8] sm:$0xff]
    %v424 = vld [vmem:[#allocation7 + $0x1f0] sm:$0xff]
    %v425 = vld [vmem:[#allocation7 + $0x1f8] sm:$0xff]
    %v426 = vld [vmem:[#allocation7 + $0x200] sm:$0xff]
    %v427 = vld [vmem:[#allocation7 + $0x208] sm:$0xff]
    %v428 = vld [vmem:[#allocation7 + $0x210] sm:$0xff]
    %v429 = vld [vmem:[#allocation7 + $0x218] sm:$0xff]
    %v430 = vld [vmem:[#allocation7 + $0x220] sm:$0xff]
    %v431 = vld [vmem:[#allocation7 + $0x228] sm:$0xff]
    %v432 = vld [vmem:[#allocation7 + $0x230] sm:$0xff]
    %v433 = vld [vmem:[#allocation7 + $0x238] sm:$0xff]
    %v434 = vld [vmem:[#allocation7 + $0x240] sm:$0xff]
    %v435 = vld [vmem:[#allocation7 + $0x248] sm:$0xff]
    %v436 = vld [vmem:[#allocation7 + $0x250] sm:$0xff]
    %v437 = vld [vmem:[#allocation7 + $0x258] sm:$0xff]
    %v438 = vld [vmem:[#allocation7 + $0x260] sm:$0xff]
    %v439 = vld [vmem:[#allocation7 + $0x268] sm:$0xff]
    %v440 = vld [vmem:[#allocation7 + $0x270] sm:$0xff]
    %v441 = vld [vmem:[#allocation7 + $0x278] sm:$0xff]
    %v442 = vld [vmem:[#allocation7 + $0x280] sm:$0xff]
    %v443 = vld [vmem:[#allocation7 + $0x288] sm:$0xff]
    %v444 = vld [vmem:[#allocation7 + $0x290] sm:$0xff]
    %v445 = vld [vmem:[#allocation7 + $0x298] sm:$0xff]
    %v446 = vld [vmem:[#allocation7 + $0x2a0] sm:$0xff]
    %v447 = vld [vmem:[#allocation7 + $0x2a8] sm:$0xff]
    %v448 = vld [vmem:[#allocation7 + $0x2b0] sm:$0xff]
    %v449 = vld [vmem:[#allocation7 + $0x2b8] sm:$0xff]
    %v450 = vld [vmem:[#allocation7 + $0x2c0] sm:$0xff]
    %v451 = vld [vmem:[#allocation7 + $0x2c8] sm:$0xff]
    %v452 = vld [vmem:[#allocation7 + $0x2d0] sm:$0xff]
    %v453 = vld [vmem:[#allocation7 + $0x2d8] sm:$0xff]
    %v454 = vld [vmem:[#allocation7 + $0x2e0] sm:$0xff]
    %v455 = vld [vmem:[#allocation7 + $0x2e8] sm:$0xff]
    %v456 = vld [vmem:[#allocation7 + $0x2f0] sm:$0xff]
    %v457 = vld [vmem:[#allocation7 + $0x2f8] sm:$0xff]
    %v458 = vld [vmem:[#allocation7 + $0x300] sm:$0xff]
    %v459 = vld [vmem:[#allocation7 + $0x308] sm:$0xff]
    %v460 = vld [vmem:[#allocation7 + $0x310] sm:$0xff]
    %v461 = vld [vmem:[#allocation7 + $0x318] sm:$0xff]
    %v462 = vld [vmem:[#allocation7 + $0x320] sm:$0xff]
    %v463 = vld [vmem:[#allocation7 + $0x328] sm:$0xff]
    %v464 = vld [vmem:[#allocation7 + $0x330] sm:$0xff]
    %v465 = vld [vmem:[#allocation7 + $0x338] sm:$0xff]
    %v466 = vld [vmem:[#allocation7 + $0x340] sm:$0xff]
    %v467 = vld [vmem:[#allocation7 + $0x348] sm:$0xff]
    %v468 = vld [vmem:[#allocation7 + $0x350] sm:$0xff]
    %v469 = vld [vmem:[#allocation7 + $0x358] sm:$0xff]
    %v470 = vld [vmem:[#allocation7 + $0x360] sm:$0xff]
    %v471 = vld [vmem:[#allocation7 + $0x368] sm:$0xff]
    %v472 = vld [vmem:[#allocation7 + $0x370] sm:$0xff]
    %v473 = vld [vmem:[#allocation7 + $0x378] sm:$0xff]
    %v474 = vld [vmem:[#allocation7 + $0x380] sm:$0xff]
    %v475 = vld [vmem:[#allocation7 + $0x388] sm:$0xff]
    %v476 = vld [vmem:[#allocation7 + $0x390] sm:$0xff]
    %v477 = vld [vmem:[#allocation7 + $0x398] sm:$0xff]
    %v478 = vld [vmem:[#allocation7 + $0x3a0] sm:$0xff]
    %v479 = vld [vmem:[#allocation7 + $0x3a8] sm:$0xff]
    %v480 = vld [vmem:[#allocation7 + $0x3b0] sm:$0xff]
    %v481 = vld [vmem:[#allocation7 + $0x3b8] sm:$0xff]
    %v482 = vld [vmem:[#allocation7 + $0x3c0] sm:$0xff]
    %v483 = vld [vmem:[#allocation7 + $0x3c8] sm:$0xff]
    %v484 = vld [vmem:[#allocation7 + $0x3d0] sm:$0xff]
    %v485 = vld [vmem:[#allocation7 + $0x3d8] sm:$0xff]
    %v486 = vld [vmem:[#allocation7 + $0x3e0] sm:$0xff]
    %v487 = vld [vmem:[#allocation7 + $0x3e8] sm:$0xff]
    %v488 = vld [vmem:[#allocation7 + $0x3f0] sm:$0xff]
    %v489 = vld [vmem:[#allocation7 + $0x3f8] sm:$0xff]
    %v490 = vld [vmem:[#allocation7 + $0x400] sm:$0xff]
    %v491 = vld [vmem:[#allocation7 + $0x408] sm:$0xff]
    %v492 = vld [vmem:[#allocation7 + $0x410] sm:$0xff]
    %v493 = vld [vmem:[#allocation7 + $0x418] sm:$0xff]
    %v494 = vld [vmem:[#allocation7 + $0x420] sm:$0xff]
    %v495 = vld [vmem:[#allocation7 + $0x428] sm:$0xff]
    %v496 = vld [vmem:[#allocation7 + $0x430] sm:$0xff]
    %v497 = vld [vmem:[#allocation7 + $0x438] sm:$0xff]
    %v498 = vld [vmem:[#allocation7 + $0x440] sm:$0xff]
    %v499 = vld [vmem:[#allocation7 + $0x448] sm:$0xff]
    %v500 = vld [vmem:[#allocation7 + $0x450] sm:$0xff]
    %v501 = vld [vmem:[#allocation7 + $0x458] sm:$0xff]
    %v502 = vld [vmem:[#allocation7 + $0x460] sm:$0xff]
    %v503 = vld [vmem:[#allocation7 + $0x468] sm:$0xff]
    %v504 = vld [vmem:[#allocation7 + $0x470] sm:$0xff]
    %v505 = vld [vmem:[#allocation7 + $0x478] sm:$0xff]
    %v506 = vld [vmem:[#allocation7 + $0x480] sm:$0xff]
    %v507 = vld [vmem:[#allocation7 + $0x488] sm:$0xff]
    %v508 = vld [vmem:[#allocation7 + $0x490] sm:$0xff]
    %v509 = vld [vmem:[#allocation7 + $0x498] sm:$0xff]
    %v510 = vld [vmem:[#allocation7 + $0x4a0] sm:$0xff]
    %v511 = vld [vmem:[#allocation7 + $0x4a8] sm:$0xff]
    %v512 = vld [vmem:[#allocation7 + $0x4b0] sm:$0xff]
    %v513 = vld [vmem:[#allocation7 + $0x4b8] sm:$0xff]
    %v514 = vld [vmem:[#allocation7 + $0x4c0] sm:$0xff]
    %v515 = vld [vmem:[#allocation7 + $0x4c8] sm:$0xff]
    %v516 = vld [vmem:[#allocation7 + $0x4d0] sm:$0xff]
    %v517 = vld [vmem:[#allocation7 + $0x4d8] sm:$0xff]
    %v518 = vld [vmem:[#allocation7 + $0x4e0] sm:$0xff]
    %v519 = vld [vmem:[#allocation7 + $0x4e8] sm:$0xff]
    %v520 = vld [vmem:[#allocation7 + $0x4f0] sm:$0xff]
    %v521 = vld [vmem:[#allocation7 + $0x4f8] sm:$0xff]
    %v522 = vld [vmem:[#allocation7 + $0x500] sm:$0xff]
    %v523 = vld [vmem:[#allocation7 + $0x508] sm:$0xff]
    %v524 = vld [vmem:[#allocation7 + $0x510] sm:$0xff]
    %v525 = vld [vmem:[#allocation7 + $0x518] sm:$0xff]
    %v526 = vld [vmem:[#allocation7 + $0x520] sm:$0xff]
    %v527 = vld [vmem:[#allocation7 + $0x528] sm:$0xff]
    %v528 = vld [vmem:[#allocation7 + $0x530] sm:$0xff]
    %v529 = vld [vmem:[#allocation7 + $0x538] sm:$0xff]
    %v530 = vld [vmem:[#allocation7 + $0x540] sm:$0xff]
    %v531 = vld [vmem:[#allocation7 + $0x548] sm:$0xff]
    %v532 = vld [vmem:[#allocation7 + $0x550] sm:$0xff]
    %v533 = vld [vmem:[#allocation7 + $0x558] sm:$0xff]
    %v534 = vld [vmem:[#allocation7 + $0x560] sm:$0xff]
    %v535 = vld [vmem:[#allocation7 + $0x568] sm:$0xff]
    %v536 = vld [vmem:[#allocation7 + $0x570] sm:$0xff]
    %v537 = vld [vmem:[#allocation7 + $0x578] sm:$0xff]
    %v538 = vld [vmem:[#allocation7 + $0x580] sm:$0xff]
    %v539 = vld [vmem:[#allocation7 + $0x588] sm:$0xff]
    %v540 = vld [vmem:[#allocation7 + $0x590] sm:$0xff]
    %v541 = vld [vmem:[#allocation7 + $0x598] sm:$0xff]
    %v542 = vld [vmem:[#allocation7 + $0x5a0] sm:$0xff]
    %v543 = vld [vmem:[#allocation7 + $0x5a8] sm:$0xff]
    %v544 = vld [vmem:[#allocation7 + $0x5b0] sm:$0xff]
    %v545 = vld [vmem:[#allocation7 + $0x5b8] sm:$0xff]
    %v546 = vld [vmem:[#allocation7 + $0x5c0] sm:$0xff]
    %v547 = vld [vmem:[#allocation7 + $0x5c8] sm:$0xff]
    %v548 = vld [vmem:[#allocation7 + $0x5d0] sm:$0xff]
    %v549 = vld [vmem:[#allocation7 + $0x5d8] sm:$0xff]
    %v550 = vld [vmem:[#allocation7 + $0x5e0] sm:$0xff]
    %v551 = vld [vmem:[#allocation7 + $0x5e8] sm:$0xff]
    %v552 = vld [vmem:[#allocation7 + $0x5f0] sm:$0xff]
    %v553 = vld [vmem:[#allocation7 + $0x5f8] sm:$0xff]
    %v554 = vld [vmem:[%s4] sm:$0x7]
    %v556 = vlaneseq
    %v557 = vshrl.u32 %v556, 7
    %v558 = vsub.s32 0, %v557
    %v559 = vrot.slane %v554, %v558
    %v560 = vlaneseq
    %v561 = vshrl.u32 %v560, 7
    %v562 = vsub.s32 1, %v561
    %v563 = vrot.slane %v554, %v562
    %v564 = vlaneseq
    %v565 = vshrl.u32 %v564, 7
    %v566 = vsub.s32 2, %v565
    %v567 = vrot.slane %v554, %v566
    %571 = vmatprep.subr.mxu0 %v363
    %572 = vmatpush1.msra.mxu0 %v362
    %573 = vmatprep.subr.mxu0 %v366
    %574 = vmatpush1.msra.mxu0 %v365
    %575 = vmatprep.subr.mxu0 %v369
    %576 = vmatpush1.msra.mxu0 %v368
    %577 = vmatprep.subr.mxu0 %v372
    %578 = vmatpush1.msra.mxu0 %v371
    %579 = vmatprep.subr.mxu0 %v375
    %580 = vmatpush1.msra.mxu0 %v374
    %581 = vmatprep.subr.mxu0 %v378
    %582 = vmatpush1.msra.mxu0 %v377
    %583 = vmatprep.subr.mxu0 %v381
    %584 = vmatpush1.msra.mxu0 %v380
    %585 = vmatprep.subr.mxu0 %v384
    %586 = vmatpush1.msra.mxu0 %v383
    %587 = vmatprep.subr.mxu0 %v387
    %588 = vmatpush1.msra.mxu0 %v386
    %589 = vmatprep.subr.mxu0 %v390
    %590 = vmatpush1.msra.mxu0 %v389
    %591 = vmatprep.subr.mxu0 %v393
    %592 = vmatpush1.msra.mxu0 %v392
    %593 = vmatprep.subr.mxu0 %v396
    %594 = vmatpush1.msra.mxu0 %v395
    %595 = vmatprep.subr.mxu0 %v399
    %596 = vmatpush1.msra.mxu0 %v398
    %597 = vmatprep.subr.mxu0 %v402
    %598 = vmatpush1.msra.mxu0 %v401
    %599 = vmatprep.subr.mxu0 %v405
    %600 = vmatpush1.msra.mxu0 %v404
    %601 = vmatprep.subr.mxu0 %v408
    %602 = vmatpush1.msra.mxu0 %v407
    %603 = vmatprep.subr.mxu0 %v411
    %604 = vmatpush1.msra.mxu0 %v410
    %605 = vmatprep.subr.mxu0 %v414
    %606 = vmatpush1.msra.mxu0 %v413
    %607 = vmatprep.subr.mxu0 %v417
    %608 = vmatpush1.msra.mxu0 %v416
    %609 = vmatprep.subr.mxu0 %v420
    %610 = vmatpush1.msra.mxu0 %v419
    %611 = vmatprep.subr.mxu0 %v423
    %612 = vmatpush1.msra.mxu0 %v422
    %613 = vmatprep.subr.mxu0 %v426
    %614 = vmatpush1.msra.mxu0 %v425
    %615 = vmatprep.subr.mxu0 %v429
    %616 = vmatpush1.msra.mxu0 %v428
    %617 = vmatprep.subr.mxu0 %v432
    %618 = vmatpush1.msra.mxu0 %v431
    %619 = vmatprep.subr.mxu0 %v435
    %620 = vmatpush1.msra.mxu0 %v434
    %621 = vmatprep.subr.mxu0 %v438
    %622 = vmatpush1.msra.mxu0 %v437
    %623 = vmatprep.subr.mxu0 %v441
    %624 = vmatpush1.msra.mxu0 %v440
    %625 = vmatprep.subr.mxu0 %v444
    %626 = vmatpush1.msra.mxu0 %v443
    %627 = vmatprep.subr.mxu0 %v447
    %628 = vmatpush1.msra.mxu0 %v446
    %629 = vmatprep.subr.mxu0 %v450
    %630 = vmatpush1.msra.mxu0 %v449
    %631 = vmatprep.subr.mxu0 %v453
    %632 = vmatpush1.msra.mxu0 %v452
    %633 = vmatprep.subr.mxu0 %v456
    %634 = vmatpush1.msra.mxu0 %v455
    %635 = vmatprep.mubr.f32.mxu0 %v359
    %636 = vmatmul.mubr.f32.gmra.mrb[0].mxu0 %v358
    %v637 = vpop.f32.mrb[0].mxu0
    %v638 = vadd.f32 %v559, %v637
    %v639 = vpop.f32.mrb[0].mxu0
    %v640 = vadd.f32 %v563, %v639
    %641 = vdwg.mxu0
    %642 = vmatprep.subr.mxu0 %v459
    %643 = vmatpush1.msra.mxu0 %v458
    %644 = vmatprep.subr.mxu0 %v462
    %645 = vmatpush1.msra.mxu0 %v461
    %646 = vmatprep.subr.mxu0 %v465
    %647 = vmatpush1.msra.mxu0 %v464
    %648 = vmatprep.subr.mxu0 %v468
    %649 = vmatpush1.msra.mxu0 %v467
    %650 = vmatprep.subr.mxu0 %v471
    %651 = vmatpush1.msra.mxu0 %v470
    %652 = vmatprep.subr.mxu0 %v474
    %653 = vmatpush1.msra.mxu0 %v473
    %654 = vmatprep.subr.mxu0 %v477
    %655 = vmatpush1.msra.mxu0 %v476
    %656 = vmatprep.subr.mxu0 %v480
    %657 = vmatpush1.msra.mxu0 %v479
    %658 = vmatprep.subr.mxu0 %v483
    %659 = vmatpush1.msra.mxu0 %v482
    %660 = vmatprep.subr.mxu0 %v486
    %661 = vmatpush1.msra.mxu0 %v485
    %662 = vmatprep.subr.mxu0 %v489
    %663 = vmatpush1.msra.mxu0 %v488
    %664 = vmatprep.subr.mxu0 %v492
    %665 = vmatpush1.msra.mxu0 %v491
    %666 = vmatprep.subr.mxu0 %v495
    %667 = vmatpush1.msra.mxu0 %v494
    %668 = vmatprep.subr.mxu0 %v498
    %669 = vmatpush1.msra.mxu0 %v497
    %670 = vmatprep.subr.mxu0 %v501
    %671 = vmatpush1.msra.mxu0 %v500
    %672 = vmatprep.subr.mxu0 %v504
    %673 = vmatpush1.msra.mxu0 %v503
    %674 = vmatprep.subr.mxu0 %v507
    %675 = vmatpush1.msra.mxu0 %v506
    %676 = vmatprep.subr.mxu0 %v510
    %677 = vmatpush1.msra.mxu0 %v509
    %678 = vmatprep.subr.mxu0 %v513
    %679 = vmatpush1.msra.mxu0 %v512
    %680 = vmatprep.subr.mxu0 %v516
    %681 = vmatpush1.msra.mxu0 %v515
    %682 = vmatprep.subr.mxu0 %v519
    %683 = vmatpush1.msra.mxu0 %v518
    %684 = vmatprep.subr.mxu0 %v522
    %685 = vmatpush1.msra.mxu0 %v521
    %686 = vmatprep.subr.mxu0 %v525
    %687 = vmatpush1.msra.mxu0 %v524
    %688 = vmatprep.subr.mxu0 %v528
    %689 = vmatpush1.msra.mxu0 %v527
    %690 = vmatprep.subr.mxu0 %v531
    %691 = vmatpush1.msra.mxu0 %v530
    %692 = vmatprep.subr.mxu0 %v534
    %693 = vmatpush1.msra.mxu0 %v533
    %694 = vmatprep.subr.mxu0 %v537
    %695 = vmatpush1.msra.mxu0 %v536
    %696 = vmatprep.subr.mxu0 %v540
    %697 = vmatpush1.msra.mxu0 %v539
    %698 = vmatprep.subr.mxu0 %v543
    %699 = vmatpush1.msra.mxu0 %v542
    %700 = vmatprep.subr.mxu0 %v546
    %701 = vmatpush1.msra.mxu0 %v545
    %702 = vmatprep.subr.mxu0 %v549
    %703 = vmatpush1.msra.mxu0 %v548
    %704 = vmatprep.subr.mxu0 %v552
    %705 = vmatpush1.msra.mxu0 %v551
    %706 = vmatprep.mubr.f32.mxu0 %v361
    %707 = vmatmul.mubr.f32.gmra.mrb[0].mxu0 %v360
    %v708 = vpop.f32.mrb[0].mxu0
    %v709 = vadd.f32 %v638, %v708
    %v710 = vpop.f32.mrb[0].mxu0
    %v711 = vadd.f32 %v640, %v710
    %712 = vdwg.mxu0
    %713 = vmatprep.subr.mxu0 0.0
    %714 = vmatpush1.msra.mxu0 %v364
    %715 = vmatprep.subr.mxu0 0.0
    %716 = vmatpush1.msra.mxu0 %v367
    %717 = vmatprep.subr.mxu0 0.0
    %718 = vmatpush1.msra.mxu0 %v370
    %719 = vmatprep.subr.mxu0 0.0
    %720 = vmatpush1.msra.mxu0 %v373
    %721 = vmatprep.subr.mxu0 0.0
    %722 = vmatpush1.msra.mxu0 %v376
    %723 = vmatprep.subr.mxu0 0.0
    %724 = vmatpush1.msra.mxu0 %v379
    %725 = vmatprep.subr.mxu0 0.0
    %726 = vmatpush1.msra.mxu0 %v382
    %727 = vmatprep.subr.mxu0 0.0
    %728 = vmatpush1.msra.mxu0 %v385
    %729 = vmatprep.subr.mxu0 0.0
    %730 = vmatpush1.msra.mxu0 %v388
    %731 = vmatprep.subr.mxu0 0.0
    %732 = vmatpush1.msra.mxu0 %v391
    %733 = vmatprep.subr.mxu0 0.0
    %734 = vmatpush1.msra.mxu0 %v394
    %735 = vmatprep.subr.mxu0 0.0
    %736 = vmatpush1.msra.mxu0 %v397
    %737 = vmatprep.subr.mxu0 0.0
    %738 = vmatpush1.msra.mxu0 %v400
    %739 = vmatprep.subr.mxu0 0.0
    %740 = vmatpush1.msra.mxu0 %v403
    %741 = vmatprep.subr.mxu0 0.0
    %742 = vmatpush1.msra.mxu0 %v406
    %743 = vmatprep.subr.mxu0 0.0
    %744 = vmatpush1.msra.mxu0 %v409
    %745 = vmatprep.subr.mxu0 0.0
    %746 = vmatpush1.msra.mxu0 %v412
    %747 = vmatprep.subr.mxu0 0.0
    %748 = vmatpush1.msra.mxu0 %v415
    %749 = vmatprep.subr.mxu0 0.0
    %750 = vmatpush1.msra.mxu0 %v418
    %751 = vmatprep.subr.mxu0 0.0
    %752 = vmatpush1.msra.mxu0 %v421
    %753 = vmatprep.subr.mxu0 0.0
    %754 = vmatpush1.msra.mxu0 %v424
    %755 = vmatprep.subr.mxu0 0.0
    %756 = vmatpush1.msra.mxu0 %v427
    %757 = vmatprep.subr.mxu0 0.0
    %758 = vmatpush1.msra.mxu0 %v430
    %759 = vmatprep.subr.mxu0 0.0
    %760 = vmatpush1.msra.mxu0 %v433
    %761 = vmatprep.subr.mxu0 0.0
    %762 = vmatpush1.msra.mxu0 %v436
    %763 = vmatprep.subr.mxu0 0.0
    %764 = vmatpush1.msra.mxu0 %v439
    %765 = vmatprep.subr.mxu0 0.0
    %766 = vmatpush1.msra.mxu0 %v442
    %767 = vmatprep.subr.mxu0 0.0
    %768 = vmatpush1.msra.mxu0 %v445
    %769 = vmatprep.subr.mxu0 0.0
    %770 = vmatpush1.msra.mxu0 %v448
    %771 = vmatprep.subr.mxu0 0.0
    %772 = vmatpush1.msra.mxu0 %v451
    %773 = vmatprep.subr.mxu0 0.0
    %774 = vmatpush1.msra.mxu0 %v454
    %775 = vmatprep.subr.mxu0 0.0
    %776 = vmatpush1.msra.mxu0 %v457
    %777 = vmatprep.mubr.f32.mxu0 %v359
    %778 = vmatmul.mubr.f32.gmra.mrb[0].mxu0 %v358
    %v779 = vpop.f32.mrb[0].mxu0
    %v780 = vadd.f32 %v567, %v779
    %v781 = vpop.f32.mrb[0].mxu0
    %782 = vdwg.mxu0
    %783 = vmatprep.subr.mxu0 0.0
    %784 = vmatpush1.msra.mxu0 %v460
    %785 = vmatprep.subr.mxu0 0.0
    %786 = vmatpush1.msra.mxu0 %v463
    %787 = vmatprep.subr.mxu0 0.0
    %788 = vmatpush1.msra.mxu0 %v466
    %789 = vmatprep.subr.mxu0 0.0
    %790 = vmatpush1.msra.mxu0 %v469
    %791 = vmatprep.subr.mxu0 0.0
    %792 = vmatpush1.msra.mxu0 %v472
    %793 = vmatprep.subr.mxu0 0.0
    %794 = vmatpush1.msra.mxu0 %v475
    %795 = vmatprep.subr.mxu0 0.0
    %796 = vmatpush1.msra.mxu0 %v478
    %797 = vmatprep.subr.mxu0 0.0
    %798 = vmatpush1.msra.mxu0 %v481
    %799 = vmatprep.subr.mxu0 0.0
    %800 = vmatpush1.msra.mxu0 %v484
    %801 = vmatprep.subr.mxu0 0.0
    %802 = vmatpush1.msra.mxu0 %v487
    %803 = vmatprep.subr.mxu0 0.0
    %804 = vmatpush1.msra.mxu0 %v490
    %805 = vmatprep.subr.mxu0 0.0
    %806 = vmatpush1.msra.mxu0 %v493
    %807 = vmatprep.subr.mxu0 0.0
    %808 = vmatpush1.msra.mxu0 %v496
    %809 = vmatprep.subr.mxu0 0.0
    %810 = vmatpush1.msra.mxu0 %v499
    %811 = vmatprep.subr.mxu0 0.0
    %812 = vmatpush1.msra.mxu0 %v502
    %813 = vmatprep.subr.mxu0 0.0
    %814 = vmatpush1.msra.mxu0 %v505
    %815 = vmatprep.subr.mxu0 0.0
    %816 = vmatpush1.msra.mxu0 %v508
    %817 = vmatprep.subr.mxu0 0.0
    %818 = vmatpush1.msra.mxu0 %v511
    %819 = vmatprep.subr.mxu0 0.0
    %820 = vmatpush1.msra.mxu0 %v514
    %821 = vmatprep.subr.mxu0 0.0
    %822 = vmatpush1.msra.mxu0 %v517
    %823 = vmatprep.subr.mxu0 0.0
    %824 = vmatpush1.msra.mxu0 %v520
    %825 = vmatprep.subr.mxu0 0.0
    %826 = vmatpush1.msra.mxu0 %v523
    %827 = vmatprep.subr.mxu0 0.0
    %828 = vmatpush1.msra.mxu0 %v526
    %829 = vmatprep.subr.mxu0 0.0
    %830 = vmatpush1.msra.mxu0 %v529
    %831 = vmatprep.subr.mxu0 0.0
    %832 = vmatpush1.msra.mxu0 %v532
    %833 = vmatprep.subr.mxu0 0.0
    %834 = vmatpush1.msra.mxu0 %v535
    %835 = vmatprep.subr.mxu0 0.0
    %836 = vmatpush1.msra.mxu0 %v538
    %837 = vmatprep.subr.mxu0 0.0
    %838 = vmatpush1.msra.mxu0 %v541
    %839 = vmatprep.subr.mxu0 0.0
    %840 = vmatpush1.msra.mxu0 %v544
    %841 = vmatprep.subr.mxu0 0.0
    %842 = vmatpush1.msra.mxu0 %v547
    %843 = vmatprep.subr.mxu0 0.0
    %844 = vmatpush1.msra.mxu0 %v550
    %845 = vmatprep.subr.mxu0 0.0
    %846 = vmatpush1.msra.mxu0 %v553
    %847 = vmatprep.mubr.f32.mxu0 %v361
    %848 = vmatmul.mubr.f32.gmra.mrb[0].mxu0 %v360
    %v849 = vpop.f32.mrb[0].mxu0
    %v850 = vadd.f32 %v780, %v849
    %v851 = vpop.f32.mrb[0].mxu0
    %852 = vdwg.mxu0
    %v853 = vtanh.pop %v709
    %v854 = vtanh.pop %v711
    %v855 = vtanh.pop %v850
    %v856 = vlaneseq
    %v857 = vand.u32 %v856, 127
    %v858 = vadd.s32 %v857, 128
    %v859 = vadd.s32 %v857, 256
    %vm860 = vcmp.lt.s32.totalorder %v857, 0
    %v861 = vsub.s32 0, %v857
    %v862 = vsel %vm860, %v861, %v857
    %v863 = vmul.u32.u64.compose %v862, 2863311531
    %v864 = vextract.low.u32 %v863
    %v865 = vextract.high.u32 %v863
    %v866 = vshrl.u32 %v865, 1
    %v867 = vmul.u32 %v866, 3
    %v868 = vsub.s32 %v862, %v867
    %v869 = vsub.s32 0, %v868
    %v870 = vsel %vm860, %v869, %v868
    %vm871 = vcmp.lt.s32.totalorder %v858, 0
    %v872 = vsub.s32 0, %v858
    %v873 = vsel %vm871, %v872, %v858
    %v874 = vmul.u32.u64.compose %v873, 2863311531
    %v875 = vextract.low.u32 %v874
    %v876 = vextract.high.u32 %v874
    %v877 = vshrl.u32 %v876, 1
    %v878 = vmul.u32 %v877, 3
    %v879 = vsub.s32 %v873, %v878
    %v880 = vsub.s32 0, %v879
    %v881 = vsel %vm871, %v880, %v879
    %vm882 = vcmp.lt.s32.totalorder %v859, 0
    %v883 = vsub.s32 0, %v859
    %v884 = vsel %vm882, %v883, %v859
    %v885 = vmul.u32.u64.compose %v884, 2863311531
    %v886 = vextract.low.u32 %v885
    %v887 = vextract.high.u32 %v885
    %v888 = vshrl.u32 %v887, 1
    %v889 = vmul.u32 %v888, 3
    %v890 = vsub.s32 %v884, %v889
    %v891 = vsub.s32 0, %v890
    %v892 = vsel %vm882, %v891, %v890
    %vm893 = vcmp.ne.s32.totalorder %v870, 0
    %vm894 = vcmp.ne.s32.totalorder %v881, 0
    %vm895 = vcmp.ne.s32.totalorder %v892, 0
    %vm896 = vcmp.lt.s32.totalorder %v870, 0
    %vm897 = vcmp.lt.s32.totalorder %v881, 0
    %vm898 = vcmp.lt.s32.totalorder %v892, 0
    %vm899 = vmand %vm896, %vm893
    %vm900 = vmand %vm897, %vm894
    %vm901 = vmand %vm898, %vm895
    %v902 = vadd.s32 %v870, 3
    %v903 = vadd.s32 %v881, 3
    %v904 = vadd.s32 %v892, 3
    %v905 = vsel %vm899, %v902, %v870
    %v906 = vsel %vm900, %v903, %v881
    %v907 = vsel %vm901, %v904, %v892
    %vm908 = vcmp.eq.s32.totalorder %v905, 1
    %vm909 = vcmp.eq.s32.totalorder %v906, 1
    %vm910 = vcmp.eq.s32.totalorder %v907, 1
    %v911 = vsel %vm908, 1.0, 0.5
    %v912 = vsel %vm909, 1.0, 0.5
    %v913 = vsel %vm910, 1.0, 0.5
    %v914 = vsel %vm908, 0.0, 0.5
    %v915 = vsel %vm909, 0.0, 0.5
    %v916 = vsel %vm910, 0.0, 0.5
    %v917 = vmul.f32 %v853, %v911
    %v918 = vmul.f32 %v854, %v912
    %v919 = vmul.f32 %v855, %v913
    %v920 = vadd.f32 %v917, %v914
    %v921 = vadd.f32 %v918, %v915
    %v922 = vadd.f32 %v919, %v916
    %923 = vst [vmem:[#allocation8] sm:$0xff] %v920
    %924 = vst [vmem:[#allocation8 + $0x8] sm:$0xff] %v921
    %925 = vst [vmem:[#allocation8 + $0x10] sm:$0xff] %v922
    // Predicated region
    $region34: #{tpu_custom_call.1} parent=1 // pred_check
      _
    $region35: #{tpu_custom_call.1} parent=1 // pred_check_branch
      %927 = sbr.rel (0) target = $region37
    $region36: #{tpu_custom_call.1} parent=1 // pred_region
      %s929 = ssub.s32 384, 384
      %930 = vsyncadd [#allocation4], %s929
      %s932 = sshll.u32 [#allocation8], 4
      %s933 = int_to_ptr.vmem [resolvable:$true] %s932
      %935 = dma.vmem_to_hbm [thread:$0]  %s933, 384, %s5, [#allocation4]
    $region37: #{tpu_custom_call.1} parent=1 // pred_fallthru
      _
    // Predicated region
    $region38: #{tpu_custom_call.1} parent=1 // pred_check
      _
    $region39: #{tpu_custom_call.1} parent=1 // pred_check_branch
      %937 = sbr.rel (0) target = $region41
    $region40: #{tpu_custom_call.1} parent=1 // pred_region
      %938 = dma.done [#allocation4], 384
    $region41: #{tpu_custom_call.1} parent=1 // pred_fallthru
      _
    %939 = vsyncpa [#allocation3], 1
    %940 = vsyncpa [#allocation6], 1
    %941 = vsyncpa [#allocation4], 1

</llo_original>
